<compile_context>
chip_gen: v5e
topology: v5e:2x2
jax: 0.10.0
libtpu: 0.0.40
codegen_flags: <defaults>
</compile_context>

<pallas_src>
import functools

import jax
import jax.numpy as jnp
import numpy as np
from jax.experimental import pallas as pl
from jax.experimental.pallas import tpu as pltpu


def _round_up(x, m):
    return ((x + m - 1) // m) * m


def _pooling_mlp_kernel(lo_ref, hi_ref, x_ref, b_ref, w1_hbm, w2_hbm, vec_hbm,
                        out_ref, stat_acc, min_acc, max_acc,
                        *, num_graphs, eps=1e-5):
    t = pl.program_id(0)
    d, tn = x_ref.shape
    b_pad = stat_acc.shape[0]

    @pl.when(t == 0)
    def _init():
        stat_acc[...] = jnp.zeros_like(stat_acc)
        max_acc[...] = jnp.full_like(max_acc, -jnp.inf)
        min_acc[...] = jnp.full_like(min_acc, jnp.inf)

    x = x_ref[...]                                     # (d, tn) f32, lane-dense
    brow = b_ref[...]                                  # (1, tn) int32, pad = -1

    # ---- segment sum / sum(x^2) / count: one fused one-hot MXU pass ---------
    gid = jax.lax.broadcasted_iota(jnp.int32, (b_pad, tn), 0)
    oh = (brow == gid).astype(jnp.float32)             # (b_pad, tn); 0 on pads
    stacked = jnp.concatenate(
        [x, x * x, jnp.ones((1, tn), jnp.float32)], axis=0)   # (2d+1, tn)
    stat_acc[...] += jax.lax.dot_general(
        oh, stacked, dimension_numbers=(((1,), (1,)), ((), ())),
        preferred_element_type=jnp.float32)            # (b_pad, 2d+1)

    # ---- segment min / max: loop only over graphs present in this tile ------
    lane = jax.lax.broadcasted_iota(jnp.int32, (d, b_pad), 1)   # hoisted
    lo = lo_ref[t]
    hi = hi_ref[t]

    def seg_body(g, carry):
        m = brow == g                                            # (1, tn)
        gmx = jnp.max(jnp.where(m, x, -jnp.inf), axis=1, keepdims=True)  # (d,1)
        gmn = jnp.min(jnp.where(m, x, jnp.inf), axis=1, keepdims=True)   # (d,1)
        sel = lane == g                                          # (d, b_pad)
        max_acc[...] = jnp.where(sel, jnp.maximum(max_acc[...], gmx),
                                 max_acc[...])
        min_acc[...] = jnp.where(sel, jnp.minimum(min_acc[...], gmn),
                                 min_acc[...])
        return carry

    jax.lax.fori_loop(lo, hi + 1, seg_body, 0)

    # ---- finalize: Linear -> BatchNorm(batch stats) -> ReLU -> Linear -------
    @pl.when(t == pl.num_programs(0) - 1)
    def _finalize():
        stats = stat_acc[...]                          # (b_pad, 2d+1)
        sums = stats[:, 0:d]
        sqs = stats[:, d:2 * d]
        cnt = stats[:, 2 * d:2 * d + 1]                # (b_pad, 1)
        row = jax.lax.broadcasted_iota(jnp.int32, (b_pad, 1), 0)
        has_nodes = cnt > 0.0
        valid = jnp.logical_and(row < num_graphs, has_nodes)
        inv = jnp.where(has_nodes, 1.0 / jnp.maximum(cnt, 1.0), 0.0)
        mean = sums * inv                              # (b_pad, d)
        var = sqs * inv - mean * mean                  # (b_pad, d)

        def mlp(w1v, w2v, vecv):
            # Weights are fetched exactly once, only on the last grid step.
            pltpu.sync_copy(w1_hbm, w1v)
            pltpu.sync_copy(w2_hbm, w2v)
            pltpu.sync_copy(vec_hbm, vecv)
            w1 = w1v[...]                              # (>=4d, h_pad)
            tdims = (((0,), (0,)), ((), ()))           # contract leading (d) dim
            # z @ W1 expressed as four d-row blocks -> no pooled-z scratch,
            # no sub-128-lane slice stores.
            h = (jnp.dot(mean, w1[0:d, :],
                         preferred_element_type=jnp.float32)
                 + jax.lax.dot_general(min_acc[...], w1[d:2 * d, :],
                                       dimension_numbers=tdims,
                                       preferred_element_type=jnp.float32)
                 + jax.lax.dot_general(max_acc[...], w1[2 * d:3 * d, :],
                                       dimension_numbers=tdims,
                                       preferred_element_type=jnp.float32)
                 + jnp.dot(var, w1[3 * d:4 * d, :],
                           preferred_element_type=jnp.float32)
                 + vecv[0:1, :])
            # Sanitize padded / empty graphs (their min/max are +-inf).
            h = jnp.where(valid, h, 0.0)

            # BatchNorm1d over the real graphs only (biased var, batch stats).
            rmask = (row < num_graphs).astype(jnp.float32)
            inv_b = 1.0 / float(num_graphs)
            mu = jnp.sum(h * rmask, axis=0, keepdims=True) * inv_b
            diff = h - mu
            var_b = jnp.sum(diff * diff * rmask, axis=0, keepdims=True) * inv_b
            hn = diff * jax.lax.rsqrt(var_b + eps) * vecv[1:2, :] + vecv[2:3, :]
            hn = jnp.maximum(hn, 0.0)
            out = jnp.dot(hn, w2v[...],
                          preferred_element_type=jnp.float32) + vecv[3:4, :]
            out_ref[...] = out.astype(out_ref.dtype)

        pl.run_scoped(mlp,
                      pltpu.VMEM(w1_hbm.shape, jnp.float32),
                      pltpu.VMEM(w2_hbm.shape, jnp.float32),
                      pltpu.VMEM(vec_hbm.shape, jnp.float32))


def pooling_layer(features, batch, params, num_graphs, *, block_rows=None):
    """features: [N, d] float, batch: [N] int32 graph ids in [0, num_graphs)."""
    n, d = features.shape
    assert batch.shape[0] == n
    hidden = params["w1"].shape[1]
    assert params["w1"].shape[0] == 4 * d

    b_pad = max(8, _round_up(num_graphs, 8))       # sublane-aligned graph rows
    h_pad = _round_up(hidden, 128)                 # lane-aligned hidden
    w1_rows = _round_up(4 * d, 8)

    # Node-tile width: as big as a modest VMEM budget allows (fewer grid steps
    # -> less per-step overhead), multiple of 512, capped at 16K.
    if block_rows is None:
        block_rows = max(512, min(16384,
                                  ((4 * 1024 * 1024) // (4 * d)) // 512 * 512))
    assert block_rows % 128 == 0

    if n <= block_rows:
        tn, n_tiles = n, 1
    else:
        tn = block_rows
        n_tiles = -(-n // tn)
    n_pad = n_tiles * tn

    # Transposed, lane-dense feature layout [d, n_pad]; pad columns are 0 and
    # carry batch id -1 so they never enter any segment.
    feats_t = jnp.zeros((d, n_pad), jnp.float32).at[:, :n].set(
        features.astype(jnp.float32).T)
    batch_p = jnp.pad(batch.astype(jnp.int32), (0, n_pad - n),
                      constant_values=-1)
    batch_row = batch_p.reshape(1, n_pad)

    # Per-tile [first_graph, last_graph] ranges for the in-kernel min/max loop
    # (correct for any batch order; tight when batch is sorted, PyG-style).
    bt = batch_p.reshape(n_tiles, tn)
    tile_hi = jnp.max(bt, axis=1).astype(jnp.int32)
    tile_lo = jnp.min(jnp.where(bt >= 0, bt, jnp.int32(num_graphs)),
                      axis=1).astype(jnp.int32)

    # Zero-padded weights (consumed once in the epilogue).  The four bias /
    # affine vectors are packed into one (8, h_pad) slab to cut DMA count.
    w1p = jnp.zeros((w1_rows, h_pad), jnp.float32).at[:4 * d, :hidden].set(
        params["w1"].astype(jnp.float32))
    w2p = jnp.zeros((h_pad, h_pad), jnp.float32).at[:hidden, :hidden].set(
        params["w2"].astype(jnp.float32))
    vecs = jnp.zeros((8, h_pad), jnp.float32)
    vecs = vecs.at[0, :hidden].set(jnp.reshape(params["b1"], (-1,)).astype(jnp.float32))
    vecs = vecs.at[1, :hidden].set(jnp.reshape(params["gamma"], (-1,)).astype(jnp.float32))
    vecs = vecs.at[2, :hidden].set(jnp.reshape(params["beta"], (-1,)).astype(jnp.float32))
    vecs = vecs.at[3, :hidden].set(jnp.reshape(params["b2"], (-1,)).astype(jnp.float32))

    # VMEM footprint estimate -> vmem_limit_bytes (kept modest for v7x's 64 MiB).
    d_s = max(8, _round_up(d, 8))
    vmem_est = (2 * d_s * tn * 4                   # feature tiles (dbl buf)
                + 2 * 8 * tn * 4                   # batch-id tiles (dbl buf)
                + 2 * b_pad * h_pad * 4            # output block
                + b_pad * _round_up(2 * d + 1, 128) * 4
                + 2 * d_s * _round_up(b_pad, 128) * 4
                + (w1_rows + h_pad + 8) * h_pad * 4)
    vmem_limit = int(min(96 * 1024 * 1024, max(32 * 1024 * 1024, 2 * vmem_est)))

    kernel = functools.partial(_pooling_mlp_kernel, num_graphs=num_graphs)

    out_full = pl.pallas_call(
        kernel,
        out_shape=jax.ShapeDtypeStruct((b_pad, h_pad), jnp.float32),
        grid_spec=pltpu.PrefetchScalarGridSpec(
            num_scalar_prefetch=2,
            grid=(n_tiles,),
            in_specs=[
                pl.BlockSpec((d, tn), lambda i, lo, hi: (0, i)),   # features^T
                pl.BlockSpec((1, tn), lambda i, lo, hi: (0, i)),   # batch ids
                pl.BlockSpec(memory_space=pl.ANY),                 # w1 (HBM)
                pl.BlockSpec(memory_space=pl.ANY),                 # w2 (HBM)
                pl.BlockSpec(memory_space=pl.ANY),                 # b1/gamma/beta/b2
            ],
            out_specs=pl.BlockSpec((b_pad, h_pad), lambda i, lo, hi: (0, 0)),
            scratch_shapes=[
                pltpu.VMEM((b_pad, 2 * d + 1), jnp.float32),  # sums|sqsums|cnt
                pltpu.VMEM((d, b_pad), jnp.float32),          # segment min
                pltpu.VMEM((d, b_pad), jnp.float32),          # segment max
            ]),
        compiler_params=pltpu.CompilerParams(
            dimension_semantics=("arbitrary",),      # accumulation across tiles
            vmem_limit_bytes=vmem_limit),
    )(tile_lo, tile_hi, feats_t, batch_row, w1p, w2p, vecs)

    return out_full[:num_graphs, :hidden]


def _reference(features, batch, params, num_graphs, eps=1e-5):
    """Pure-JAX reference matching the PyTorch forward."""
    x = features.astype(jnp.float32)
    oh = (batch[None, :] == jnp.arange(num_graphs)[:, None]).astype(jnp.float32)
    cnt = jnp.sum(oh, axis=1, keepdims=True)
    mean = (oh @ x) / cnt
    sqm = (oh @ (x * x)) / cnt
    var = sqm - mean * mean
    mask = oh[:, :, None] > 0.5
    mx = jnp.max(jnp.where(mask, x[None], -jnp.inf), axis=1)
    mn = jnp.min(jnp.where(mask, x[None], jnp.inf), axis=1)
    z = jnp.concatenate([mean, mn, mx, var], axis=-1)
    h = z @ params["w1"] + jnp.reshape(params["b1"], (1, -1))
    mu = jnp.mean(h, axis=0, keepdims=True)
    v = jnp.mean((h - mu) ** 2, axis=0, keepdims=True)
    h = (h - mu) * jax.lax.rsqrt(v + eps) * jnp.reshape(params["gamma"], (1, -1)) \
        + jnp.reshape(params["beta"], (1, -1))
    h = jnp.maximum(h, 0.0)
    return h @ params["w2"] + jnp.reshape(params["b2"], (1, -1))


def _make_case(n_nodes, d, hidden, num_graphs, seed):
    key = jax.random.PRNGKey(seed)
    k_feat, k_w1, k_b1, k_w2, k_b2 = jax.random.split(key, 5)
    features = jax.random.normal(k_feat, (n_nodes, d), dtype=jnp.float32)
    sizes = np.full(num_graphs, n_nodes // num_graphs, dtype=np.int64)
    sizes[: n_nodes % num_graphs] += 1
    batch = jnp.asarray(np.repeat(np.arange(num_graphs), sizes),
                        dtype=jnp.int32)
    params = dict(
        w1=jax.random.normal(k_w1, (4 * d, hidden), jnp.float32)
        * (1.0 / jnp.sqrt(4 * d)),
        b1=jax.random.normal(k_b1, (1, hidden), jnp.float32) * 0.01,
        gamma=jnp.ones((1, hidden), jnp.float32),
        beta=jnp.zeros((1, hidden), jnp.float32),
        w2=jax.random.normal(k_w2, (hidden, hidden), jnp.float32)
        * (1.0 / jnp.sqrt(hidden)),
        b2=jax.random.normal(k_b2, (1, hidden), jnp.float32) * 0.01,
    )
    return features, batch, params


if __name__ == "__main__":
    # Case 1: small single-tile batch (d=8, hidden=32, 4 graphs x 4 nodes).
    features, batch, params = _make_case(16, 8, 32, 4, seed=0)
    out = pooling_layer(features, batch, params, 4)
    jax.block_until_ready(out)
    assert out.shape == (4, 32)
    ref = _reference(features, batch, params, 4)
    err = float(jnp.max(jnp.abs(out - ref)))
    assert err < 2e-3, f"case1 max abs error vs reference: {err}"

    # Case 2: multi-tile accumulation path with a ragged tail (3 node tiles).
    features2, batch2, params2 = _make_case(3000, 8, 64, 12, seed=1)
    out2 = pooling_layer(features2, batch2, params2, 12, block_rows=1024)
    jax.block_until_ready(out2)
    assert out2.shape == (12, 64)
    ref2 = _reference(features2, batch2, params2, 12)
    err2 = float(jnp.max(jnp.abs(out2 - ref2)))
    assert err2 < 2e-3, f"case2 max abs error vs reference: {err2}"

    print("KERNEL_OK")
</pallas_src>

<mosaic_0001>
module attributes {stable_mosaic.version = 11 : i64} {
  func.func @_pooling_mlp_kernel(%arg0: i32, %arg1: memref<1xi32, #tpu.memory_space<smem>>, %arg2: memref<1xi32, #tpu.memory_space<smem>>, %arg3: memref<8x16xf32, #tpu.memory_space<vmem>>, %arg4: memref<1x16xi32, #tpu.memory_space<vmem>>, %arg5: memref<32x128xf32, #tpu.memory_space<any>>, %arg6: memref<128x128xf32, #tpu.memory_space<any>>, %arg7: memref<8x128xf32, #tpu.memory_space<any>>, %arg8: memref<8x128xf32, #tpu.memory_space<vmem>>, %arg9: memref<8x17xf32, #tpu.memory_space<vmem>>, %arg10: memref<8x8xf32, #tpu.memory_space<vmem>>, %arg11: memref<8x8xf32, #tpu.memory_space<vmem>>) attributes {dimension_semantics = [#tpu.dimension_semantics<arbitrary>], iteration_bounds = array<i64: 1>, scalar_prefetch = 2 : i64, scratch_operands = 3 : i64, tpu.core_type = #tpu.core_type<tc>, window_params = [{transform_indices = @transform_0, window_bounds = array<i64: 8, 16>}, {transform_indices = @transform_1, window_bounds = array<i64: 1, 16>}, {}, {}, {}, {pipeline_mode = #tpu.pipeline_mode<synchronous>, transform_indices = @transform_5, window_bounds = array<i64: 8, 128>}]} {
    %c0_i32 = arith.constant 0 : i32
    %0 = arith.cmpi eq, %arg0, %c0_i32 : i32
    %1 = arith.extui %0 : i1 to i32
    %c0_i32_0 = arith.constant 0 : i32
    %2 = arith.cmpi ne, %1, %c0_i32_0 : i32
    scf.if %2 {
      %cst_13 = arith.constant 0.000000e+00 : f32
      %28 = vector.broadcast %cst_13 : f32 to vector<8x17xf32>
      %c0_14 = arith.constant 0 : index
      %c0_15 = arith.constant 0 : index
      %29 = vector.load %arg9[%c0_14, %c0_15] : memref<8x17xf32, #tpu.memory_space<vmem>>, vector<8x17xf32>
      tpu.vector_store %arg9[%c0_14, %c0_15], %28 {strides = array<i32>} : memref<8x17xf32, #tpu.memory_space<vmem>>, vector<8x17xf32>,
      %cst_16 = arith.constant 0xFF800000 : f32
      %30 = vector.broadcast %cst_16 : f32 to vector<8x8xf32>
      %c0_17 = arith.constant 0 : index
      %c0_18 = arith.constant 0 : index
      %31 = vector.load %arg11[%c0_17, %c0_18] : memref<8x8xf32, #tpu.memory_space<vmem>>, vector<8x8xf32>
      tpu.vector_store %arg11[%c0_17, %c0_18], %30 {strides = array<i32>} : memref<8x8xf32, #tpu.memory_space<vmem>>, vector<8x8xf32>,
      %cst_19 = arith.constant 0x7F800000 : f32
      %32 = vector.broadcast %cst_19 : f32 to vector<8x8xf32>
      %c0_20 = arith.constant 0 : index
      %c0_21 = arith.constant 0 : index
      %33 = vector.load %arg10[%c0_20, %c0_21] : memref<8x8xf32, #tpu.memory_space<vmem>>, vector<8x8xf32>
      tpu.vector_store %arg10[%c0_20, %c0_21], %32 {strides = array<i32>} : memref<8x8xf32, #tpu.memory_space<vmem>>, vector<8x8xf32>,
    } else {
    }
    %c0 = arith.constant 0 : index
    %c0_1 = arith.constant 0 : index
    %3 = vector.load %arg3[%c0, %c0_1] : memref<8x16xf32, #tpu.memory_space<vmem>>, vector<8x16xf32>
    %c0_2 = arith.constant 0 : index
    %c0_3 = arith.constant 0 : index
    %4 = vector.load %arg4[%c0_2, %c0_3] : memref<1x16xi32, #tpu.memory_space<vmem>>, vector<1x16xi32>
    %5 = tpu.iota {dimensions = array<i32: 0>} : vector<8x16xi32>
    %6 = vector.broadcast %4 : vector<1x16xi32> to vector<8x16xi32>
    %7 = arith.cmpi eq, %6, %5 : vector<8x16xi32>
    %8 = arith.extui %7 : vector<8x16xi1> to vector<8x16xi32>
    %9 = arith.sitofp %8 : vector<8x16xi32> to vector<8x16xf32>
    %10 = arith.mulf %3, %3 : vector<8x16xf32>
    %cst = arith.constant 1.000000e+00 : f32
    %11 = vector.broadcast %cst : f32 to vector<1x16xf32>
    %12 = tpu.concatenate %3, %10, %11 in 0 : vector<8x16xf32>, vector<8x16xf32>, vector<1x16xf32> -> vector<17x16xf32>
    %c0_4 = arith.constant 0 : index
    %c0_5 = arith.constant 0 : index
    %13 = vector.load %arg9[%c0_4, %c0_5] : memref<8x17xf32, #tpu.memory_space<vmem>>, vector<8x17xf32>
    %cst_6 = arith.constant dense<0.000000e+00> : vector<8x17xf32>
    %14 = tpu.matmul %9, %12, %cst_6 {dimension_numbers = #tpu.dot_dimension_numbers<[1], [1], [0], [0], [0, 0, 1, 0], [], []>} : vector<8x16xf32>, vector<17x16xf32>, vector<8x17xf32> -> vector<8x17xf32>
    %15 = arith.addf %13, %14 : vector<8x17xf32>
    %c0_7 = arith.constant 0 : index
    %c0_8 = arith.constant 0 : index
    %16 = vector.load %arg9[%c0_7, %c0_8] : memref<8x17xf32, #tpu.memory_space<vmem>>, vector<8x17xf32>
    tpu.vector_store %arg9[%c0_7, %c0_8], %15 {strides = array<i32>} : memref<8x17xf32, #tpu.memory_space<vmem>>, vector<8x17xf32>,
    %17 = tpu.iota {dimensions = array<i32: 1>} : vector<8x8xi32>
    %18 = arith.index_cast %arg0 : i32 to index
    %19 = memref.load %arg1[%18] : memref<1xi32, #tpu.memory_space<smem>>
    %20 = arith.index_cast %arg0 : i32 to index
    %21 = memref.load %arg2[%20] : memref<1xi32, #tpu.memory_space<smem>>
    %c1_i32 = arith.constant 1 : i32
    %22 = arith.addi %21, %c1_i32 : i32
    %c0_i32_9 = arith.constant 0 : i32
    %23 = arith.subi %22, %19 : i32
    %24 = arith.addi %19, %23 : i32
    %c1_i32_10 = arith.constant 1 : i32
    scf.for %arg12 = %19 to %24 step %c1_i32_10  : i32 {
      %28 = vector.broadcast %arg12 : i32 to vector<1x16xi32>
      %29 = arith.cmpi eq, %4, %28 : vector<1x16xi32>
      %cst_13 = arith.constant 0xFF800000 : f32
      %30 = vector.shape_cast %29 : vector<1x16xi1> to vector<1x16xi1>
      %31 = vector.broadcast %30 : vector<1x16xi1> to vector<8x16xi1>
      %32 = vector.broadcast %cst_13 : f32 to vector<8x16xf32>
      %33 = arith.select %31, %3, %32 : vector<8x16xi1>, vector<8x16xf32>
      %cst_14 = arith.constant dense<0xFF800000> : vector<8xf32>
      %34 = vector.multi_reduction <maximumf>, %33, %cst_14 [1] : vector<8x16xf32> to vector<8xf32>
      %35 = vector.shape_cast %34 : vector<8xf32> to vector<8x1xf32>
      %cst_15 = arith.constant 0x7F800000 : f32
      %36 = vector.shape_cast %29 : vector<1x16xi1> to vector<1x16xi1>
      %37 = vector.broadcast %36 : vector<1x16xi1> to vector<8x16xi1>
      %38 = vector.broadcast %cst_15 : f32 to vector<8x16xf32>
      %39 = arith.select %37, %3, %38 : vector<8x16xi1>, vector<8x16xf32>
      %cst_16 = arith.constant dense<0x7F800000> : vector<8xf32>
      %40 = vector.multi_reduction <minimumf>, %39, %cst_16 [1] : vector<8x16xf32> to vector<8xf32>
      %41 = vector.shape_cast %40 : vector<8xf32> to vector<8x1xf32>
      %42 = vector.broadcast %arg12 : i32 to vector<8x8xi32>
      %43 = arith.cmpi eq, %17, %42 : vector<8x8xi32>
      %c0_17 = arith.constant 0 : index
      %c0_18 = arith.constant 0 : index
      %44 = vector.load %arg11[%c0_17, %c0_18] : memref<8x8xf32, #tpu.memory_space<vmem>>, vector<8x8xf32>
      %45 = vector.broadcast %35 : vector<8x1xf32> to vector<8x8xf32>
      %46 = arith.maximumf %44, %45 : vector<8x8xf32>
      %c0_19 = arith.constant 0 : index
      %c0_20 = arith.constant 0 : index
      %47 = vector.load %arg11[%c0_19, %c0_20] : memref<8x8xf32, #tpu.memory_space<vmem>>, vector<8x8xf32>
      %48 = arith.select %43, %46, %47 : vector<8x8xi1>, vector<8x8xf32>
      %c0_21 = arith.constant 0 : index
      %c0_22 = arith.constant 0 : index
      %49 = vector.load %arg11[%c0_21, %c0_22] : memref<8x8xf32, #tpu.memory_space<vmem>>, vector<8x8xf32>
      tpu.vector_store %arg11[%c0_21, %c0_22], %48 {strides = array<i32>} : memref<8x8xf32, #tpu.memory_space<vmem>>, vector<8x8xf32>,
      %c0_23 = arith.constant 0 : index
      %c0_24 = arith.constant 0 : index
      %50 = vector.load %arg10[%c0_23, %c0_24] : memref<8x8xf32, #tpu.memory_space<vmem>>, vector<8x8xf32>
      %51 = vector.broadcast %41 : vector<8x1xf32> to vector<8x8xf32>
      %52 = arith.minimumf %50, %51 : vector<8x8xf32>
      %c0_25 = arith.constant 0 : index
      %c0_26 = arith.constant 0 : index
      %53 = vector.load %arg10[%c0_25, %c0_26] : memref<8x8xf32, #tpu.memory_space<vmem>>, vector<8x8xf32>
      %54 = arith.select %43, %52, %53 : vector<8x8xi1>, vector<8x8xf32>
      %c0_27 = arith.constant 0 : index
      %c0_28 = arith.constant 0 : index
      %55 = vector.load %arg10[%c0_27, %c0_28] : memref<8x8xf32, #tpu.memory_space<vmem>>, vector<8x8xf32>
      tpu.vector_store %arg10[%c0_27, %c0_28], %54 {strides = array<i32>} : memref<8x8xf32, #tpu.memory_space<vmem>>, vector<8x8xf32>,
    }
    %c0_i32_11 = arith.constant 0 : i32
    %25 = arith.cmpi eq, %arg0, %c0_i32_11 : i32
    %26 = arith.extui %25 : i1 to i32
    %c0_i32_12 = arith.constant 0 : i32
    %27 = arith.cmpi ne, %26, %c0_i32_12 : i32
    scf.if %27 {
      %c0_13 = arith.constant 0 : index
      %c0_14 = arith.constant 0 : index
      %28 = vector.load %arg9[%c0_13, %c0_14] : memref<8x17xf32, #tpu.memory_space<vmem>>, vector<8x17xf32>
      %29 = vector.extract_strided_slice %28 {offsets = [0, 0], sizes = [8, 8], strides = [1, 1]} : vector<8x17xf32> to vector<8x8xf32>
      %30 = vector.extract_strided_slice %28 {offsets = [0, 8], sizes = [8, 8], strides = [1, 1]} : vector<8x17xf32> to vector<8x8xf32>
      %31 = vector.extract_strided_slice %28 {offsets = [0, 16], sizes = [8, 1], strides = [1, 1]} : vector<8x17xf32> to vector<8x1xf32>
      %32 = tpu.iota {dimensions = array<i32: 0>} : vector<8x1xi32>
      %cst_15 = arith.constant 0.000000e+00 : f32
      %33 = vector.broadcast %cst_15 : f32 to vector<8x1xf32>
      %34 = arith.cmpf ogt, %31, %33 : vector<8x1xf32>
      %c4_i32 = arith.constant 4 : i32
      %35 = vector.broadcast %c4_i32 : i32 to vector<8x1xi32>
      %36 = arith.cmpi slt, %32, %35 : vector<8x1xi32>
      %37 = arith.andi %36, %34 : vector<8x1xi1>
      %cst_16 = arith.constant 1.000000e+00 : f32
      %38 = vector.broadcast %cst_16 : f32 to vector<8x1xf32>
      %39 = arith.maximumf %31, %38 : vector<8x1xf32>
      %cst_17 = arith.constant 1.000000e+00 : f32
      %40 = vector.broadcast %cst_17 : f32 to vector<8x1xf32>
      %41 = arith.divf %40, %39 : vector<8x1xf32>
      %cst_18 = arith.constant 0.000000e+00 : f32
      %42 = vector.broadcast %cst_18 : f32 to vector<8x1xf32>
      %43 = arith.select %34, %41, %42 : vector<8x1xi1>, vector<8x1xf32>
      %44 = vector.broadcast %43 : vector<8x1xf32> to vector<8x8xf32>
      %45 = arith.mulf %29, %44 : vector<8x8xf32>
      %46 = vector.broadcast %43 : vector<8x1xf32> to vector<8x8xf32>
      %47 = arith.mulf %30, %46 : vector<8x8xf32>
      %48 = arith.mulf %45, %45 : vector<8x8xf32>
      %49 = arith.subf %47, %48 : vector<8x8xf32>
      "tpu.region"() ({
        %alloca = memref.alloca() : memref<32x128xf32, #tpu.memory_space<vmem>>
        %alloca_19 = memref.alloca() : memref<128x128xf32, #tpu.memory_space<vmem>>
        %alloca_20 = memref.alloca() : memref<8x128xf32, #tpu.memory_space<vmem>>
        "tpu.region"() ({
          %109 = tpu.sem_alloc : memref<!tpu.dma_semaphore, #tpu.memory_space<semaphore_mem>>
          tpu.enqueue_dma source(%arg5 : memref<32x128xf32, #tpu.memory_space<any>>) target(%alloca : memref<32x128xf32, #tpu.memory_space<vmem>>) target_semaphore(%109 : memref<!tpu.dma_semaphore, #tpu.memory_space<semaphore_mem>>)
          tpu.wait_dma2 semaphore(%109 : memref<!tpu.dma_semaphore, #tpu.memory_space<semaphore_mem>>) src(%arg5 : memref<32x128xf32, #tpu.memory_space<any>>) dst(%alloca : memref<32x128xf32, #tpu.memory_space<vmem>>)
          tpu.yield
        }) : () -> ()
        "tpu.region"() ({
          %109 = tpu.sem_alloc : memref<!tpu.dma_semaphore, #tpu.memory_space<semaphore_mem>>
          tpu.enqueue_dma source(%arg6 : memref<128x128xf32, #tpu.memory_space<any>>) target(%alloca_19 : memref<128x128xf32, #tpu.memory_space<vmem>>) target_semaphore(%109 : memref<!tpu.dma_semaphore, #tpu.memory_space<semaphore_mem>>)
          tpu.wait_dma2 semaphore(%109 : memref<!tpu.dma_semaphore, #tpu.memory_space<semaphore_mem>>) src(%arg6 : memref<128x128xf32, #tpu.memory_space<any>>) dst(%alloca_19 : memref<128x128xf32, #tpu.memory_space<vmem>>)
          tpu.yield
        }) : () -> ()
        "tpu.region"() ({
          %109 = tpu.sem_alloc : memref<!tpu.dma_semaphore, #tpu.memory_space<semaphore_mem>>
          tpu.enqueue_dma source(%arg7 : memref<8x128xf32, #tpu.memory_space<any>>) target(%alloca_20 : memref<8x128xf32, #tpu.memory_space<vmem>>) target_semaphore(%109 : memref<!tpu.dma_semaphore, #tpu.memory_space<semaphore_mem>>)
          tpu.wait_dma2 semaphore(%109 : memref<!tpu.dma_semaphore, #tpu.memory_space<semaphore_mem>>) src(%arg7 : memref<8x128xf32, #tpu.memory_space<any>>) dst(%alloca_20 : memref<8x128xf32, #tpu.memory_space<vmem>>)
          tpu.yield
        }) : () -> ()
        %c0_21 = arith.constant 0 : index
        %c0_22 = arith.constant 0 : index
        %50 = vector.load %alloca[%c0_21, %c0_22] : memref<32x128xf32, #tpu.memory_space<vmem>>, vector<32x128xf32>
        %51 = vector.extract_strided_slice %50 {offsets = [0, 0], sizes = [8, 128], strides = [1, 1]} : vector<32x128xf32> to vector<8x128xf32>
        %cst_23 = arith.constant dense<0.000000e+00> : vector<8x128xf32>
        %52 = tpu.matmul %45, %51, %cst_23 {dimension_numbers = #tpu.dot_dimension_numbers<[1], [0], [0], [1], [0, 0, 1, 1], [], []>} : vector<8x8xf32>, vector<8x128xf32>, vector<8x128xf32> -> vector<8x128xf32>
        %c0_24 = arith.constant 0 : index
        %c0_25 = arith.constant 0 : index
        %53 = vector.load %arg10[%c0_24, %c0_25] : memref<8x8xf32, #tpu.memory_space<vmem>>, vector<8x8xf32>
        %54 = vector.extract_strided_slice %50 {offsets = [8, 0], sizes = [8, 128], strides = [1, 1]} : vector<32x128xf32> to vector<8x128xf32>
        %cst_26 = arith.constant dense<0.000000e+00> : vector<8x128xf32>
        %55 = tpu.matmul %53, %54, %cst_26 {dimension_numbers = #tpu.dot_dimension_numbers<[0], [0], [1], [1], [0, 1, 1, 1], [], []>} : vector<8x8xf32>, vector<8x128xf32>, vector<8x128xf32> -> vector<8x128xf32>
        %56 = arith.addf %52, %55 : vector<8x128xf32>
        %c0_27 = arith.constant 0 : index
        %c0_28 = arith.constant 0 : index
        %57 = vector.load %arg11[%c0_27, %c0_28] : memref<8x8xf32, #tpu.memory_space<vmem>>, vector<8x8xf32>
        %58 = vector.extract_strided_slice %50 {offsets = [16, 0], sizes = [8, 128], strides = [1, 1]} : vector<32x128xf32> to vector<8x128xf32>
        %cst_29 = arith.constant dense<0.000000e+00> : vector<8x128xf32>
        %59 = tpu.matmul %57, %58, %cst_29 {dimension_numbers = #tpu.dot_dimension_numbers<[0], [0], [1], [1], [0, 1, 1, 1], [], []>} : vector<8x8xf32>, vector<8x128xf32>, vector<8x128xf32> -> vector<8x128xf32>
        %60 = arith.addf %56, %59 : vector<8x128xf32>
        %61 = vector.extract_strided_slice %50 {offsets = [24, 0], sizes = [8, 128], strides = [1, 1]} : vector<32x128xf32> to vector<8x128xf32>
        %cst_30 = arith.constant dense<0.000000e+00> : vector<8x128xf32>
        %62 = tpu.matmul %49, %61, %cst_30 {dimension_numbers = #tpu.dot_dimension_numbers<[1], [0], [0], [1], [0, 0, 1, 1], [], []>} : vector<8x8xf32>, vector<8x128xf32>, vector<8x128xf32> -> vector<8x128xf32>
        %63 = arith.addf %60, %62 : vector<8x128xf32>
        %c0_31 = arith.constant 0 : index
        %c0_32 = arith.constant 0 : index
        %64 = vector.load %alloca_20[%c0_31, %c0_32] : memref<8x128xf32, #tpu.memory_space<vmem>>, vector<1x128xf32>
        %65 = vector.broadcast %64 : vector<1x128xf32> to vector<8x128xf32>
        %66 = arith.addf %63, %65 : vector<8x128xf32>
        %cst_33 = arith.constant 0.000000e+00 : f32
        %67 = vector.shape_cast %37 : vector<8x1xi1> to vector<8x1xi1>
        %68 = vector.broadcast %67 : vector<8x1xi1> to vector<8x128xi1>
        %69 = vector.broadcast %cst_33 : f32 to vector<8x128xf32>
        %70 = arith.select %68, %66, %69 : vector<8x128xi1>, vector<8x128xf32>
        %c4_i32_34 = arith.constant 4 : i32
        %71 = vector.broadcast %c4_i32_34 : i32 to vector<8x1xi32>
        %72 = arith.cmpi slt, %32, %71 : vector<8x1xi32>
        %73 = arith.extui %72 : vector<8x1xi1> to vector<8x1xi32>
        %74 = arith.sitofp %73 : vector<8x1xi32> to vector<8x1xf32>
        %75 = vector.broadcast %74 : vector<8x1xf32> to vector<8x128xf32>
        %76 = arith.mulf %70, %75 : vector<8x128xf32>
        %cst_35 = arith.constant dense<0.000000e+00> : vector<128xf32>
        %77 = vector.multi_reduction <add>, %76, %cst_35 [0] : vector<8x128xf32> to vector<128xf32>
        %78 = vector.shape_cast %77 : vector<128xf32> to vector<1x128xf32>
        %cst_36 = arith.constant 2.500000e-01 : f32
        %79 = vector.broadcast %cst_36 : f32 to vector<1x128xf32>
        %80 = arith.mulf %78, %79 : vector<1x128xf32>
        %81 = vector.broadcast %80 : vector<1x128xf32> to vector<8x128xf32>
        %82 = arith.subf %70, %81 : vector<8x128xf32>
        %83 = arith.mulf %82, %82 : vector<8x128xf32>
        %84 = vector.broadcast %74 : vector<8x1xf32> to vector<8x128xf32>
        %85 = arith.mulf %83, %84 : vector<8x128xf32>
        %cst_37 = arith.constant dense<0.000000e+00> : vector<128xf32>
        %86 = vector.multi_reduction <add>, %85, %cst_37 [0] : vector<8x128xf32> to vector<128xf32>
        %87 = vector.shape_cast %86 : vector<128xf32> to vector<1x128xf32>
        %cst_38 = arith.constant 2.500000e-01 : f32
        %88 = vector.broadcast %cst_38 : f32 to vector<1x128xf32>
        %89 = arith.mulf %87, %88 : vector<1x128xf32>
        %cst_39 = arith.constant 9.99999974E-6 : f32
        %90 = vector.broadcast %cst_39 : f32 to vector<1x128xf32>
        %91 = arith.addf %89, %90 : vector<1x128xf32>
        %92 = math.rsqrt %91 : vector<1x128xf32>
        %93 = vector.broadcast %92 : vector<1x128xf32> to vector<8x128xf32>
        %94 = arith.mulf %82, %93 : vector<8x128xf32>
        %c1 = arith.constant 1 : index
        %c0_40 = arith.constant 0 : index
        %95 = vector.load %alloca_20[%c1, %c0_40] : memref<8x128xf32, #tpu.memory_space<vmem>>, vector<1x128xf32>
        %96 = vector.broadcast %95 : vector<1x128xf32> to vector<8x128xf32>
        %97 = arith.mulf %94, %96 : vector<8x128xf32>
        %c2 = arith.constant 2 : index
        %c0_41 = arith.constant 0 : index
        %98 = vector.load %alloca_20[%c2, %c0_41] : memref<8x128xf32, #tpu.memory_space<vmem>>, vector<1x128xf32>
        %99 = vector.broadcast %98 : vector<1x128xf32> to vector<8x128xf32>
        %100 = arith.addf %97, %99 : vector<8x128xf32>
        %cst_42 = arith.constant 0.000000e+00 : f32
        %101 = vector.broadcast %cst_42 : f32 to vector<8x128xf32>
        %102 = arith.maximumf %100, %101 : vector<8x128xf32>
        %c0_43 = arith.constant 0 : index
        %c0_44 = arith.constant 0 : index
        %103 = vector.load %alloca_19[%c0_43, %c0_44] : memref<128x128xf32, #tpu.memory_space<vmem>>, vector<128x128xf32>
        %cst_45 = arith.constant dense<0.000000e+00> : vector<8x128xf32>
        %104 = tpu.matmul %102, %103, %cst_45 {dimension_numbers = #tpu.dot_dimension_numbers<[1], [0], [0], [1], [0, 0, 1, 1], [], []>} : vector<8x128xf32>, vector<128x128xf32>, vector<8x128xf32> -> vector<8x128xf32>
        %c3 = arith.constant 3 : index
        %c0_46 = arith.constant 0 : index
        %105 = vector.load %alloca_20[%c3, %c0_46] : memref<8x128xf32, #tpu.memory_space<vmem>>, vector<1x128xf32>
        %106 = vector.broadcast %105 : vector<1x128xf32> to vector<8x128xf32>
        %107 = arith.addf %104, %106 : vector<8x128xf32>
        %c0_47 = arith.constant 0 : index
        %c0_48 = arith.constant 0 : index
        %108 = vector.load %arg8[%c0_47, %c0_48] : memref<8x128xf32, #tpu.memory_space<vmem>>, vector<8x128xf32>
        tpu.vector_store %arg8[%c0_47, %c0_48], %107 {strides = array<i32>} : memref<8x128xf32, #tpu.memory_space<vmem>>, vector<8x128xf32>,
        tpu.yield
      }) : () -> ()
    } else {
    }
    return
  }
  func.func @transform_0(%arg0: i32, %arg1: memref<1xi32, #tpu.memory_space<smem>>, %arg2: memref<1xi32, #tpu.memory_space<smem>>) -> (i32, i32) {
    %c0_i32 = arith.constant 0 : i32
    %c0_i32_0 = arith.constant 0 : i32
    return %c0_i32, %arg0 : i32, i32
  }
  func.func @transform_1(%arg0: i32, %arg1: memref<1xi32, #tpu.memory_space<smem>>, %arg2: memref<1xi32, #tpu.memory_space<smem>>) -> (i32, i32) {
    %c0_i32 = arith.constant 0 : i32
    %c0_i32_0 = arith.constant 0 : i32
    return %c0_i32, %arg0 : i32, i32
  }
  func.func @transform_5(%arg0: i32, %arg1: memref<1xi32, #tpu.memory_space<smem>>, %arg2: memref<1xi32, #tpu.memory_space<smem>>) -> (i32, i32) {
    %c0_i32 = arith.constant 0 : i32
    %c0_i32_0 = arith.constant 0 : i32
    %c0_i32_1 = arith.constant 0 : i32
    return %c0_i32, %c0_i32_0 : i32, i32
  }
}

</mosaic_0001>

<llo_original>
// kernel: tpu_custom_call.1
$region0: #{tpu_custom_call.1}
  #allocation0 [shape = 'u32[]', space=smem, size = 0x4, offset = 0x4, fixed_abs, tag = 'smem constant byte address 0x4 - core index']
  #allocation1 [shape = 'u32[72,128]{1,0:T(1,128)}', space=vmem, size = 0x9000, scoped, tag = 'internal scratch']
  #allocation2 [shape = 'f32[8,17]{1,0:T(8,128)}', space=vmem, size = 0x1000, scoped, tag = 'scratch operand']
  #allocation3 [shape = 'f32[8,8]{1,0:T(8,128)}', space=vmem, size = 0x1000, scoped, tag = 'scratch operand']
  #allocation4 [shape = 'f32[8,8]{1,0:T(8,128)}', space=vmem, size = 0x1000, scoped, tag = 'scratch operand']
  #allocation5 [shape = 's32[1]{0}', space=sflag, size = 0x4, scoped, tag = 'scoped memory for tpu_custom_call.1']
  #allocation6 [shape = 's32[1]{0:T(128)S(6)}', space=smem, size = 0x200, scoped, tag = 'prefetched SMEM operand 0']
  #allocation7 [shape = 's32[1]{0:T(128)S(6)}', space=smem, size = 0x200, scoped, tag = 'prefetched SMEM operand 1']
  #allocation16 [shape = 's32[]', space=sflag, size = 0x4, offset = 0, fixed_abs, tag = 'sflag constant byte address 0x0 - dummy sync flag']
  #allocation17 [shape = 's32[]', space=sflag, size = 0x4, offset = 0, fixed_abs, tag = 'sflag constant byte address 0x0 - dummy sync flag']
  #allocation18 [shape = 'u32[]', space=smem, size = 0x4, offset = 0x44, fixed_abs, tag = 'smem constant byte address 0x44 - assertion arg 0']
  #allocation19 [shape = 'u32[]', space=smem, size = 0x4, offset = 0x48, fixed_abs, tag = 'smem constant byte address 0x48 - assertion arg 1']
  #allocation21 [shape = 's32[]', space=sflag, size = 0x4, offset = 0, fixed_abs, tag = 'sflag constant byte address 0x0 - dummy sync flag']
  #allocation22 [shape = 's32[]', space=sflag, size = 0x4, offset = 0, fixed_abs, tag = 'sflag constant byte address 0x0 - dummy sync flag']
  #allocation24 [shape = 's32[]', space=sflag, size = 0x4, offset = 0, fixed_abs, tag = 'sflag constant byte address 0x0 - dummy sync flag']
  #allocation25 [shape = 's32[]', space=sflag, size = 0x4, offset = 0, fixed_abs, tag = 'sflag constant byte address 0x0 - dummy sync flag']
  %s0 = inlined_call_operand.<no memory space> [shape: s32[1], index: 0, kind: input, shape index: {}]
  %s1 = inlined_call_operand.<no memory space> [shape: s32[1], index: 1, kind: input, shape index: {}]
  %s2 = inlined_call_operand.hbm [shape: f32[8,16], index: 2, kind: input, shape index: {}]
  %s3 = inlined_call_operand.vmem [shape: s32[1,16], index: 3, kind: input, shape index: {}]
  %s4 = inlined_call_operand.hbm [shape: f32[32,128], index: 4, kind: input, shape index: {}]
  %s5 = inlined_call_operand.hbm [shape: f32[128,128], index: 5, kind: input, shape index: {}]
  %s6 = inlined_call_operand.hbm [shape: f32[8,128], index: 6, kind: input, shape index: {}]
  %s7 = inlined_call_operand.hbm [shape: f32[8,128], index: 7, kind: output, shape index: {}]
  %s8 = sld [smem:[#allocation0]]
  $region53: #{tpu_custom_call.1} parent=0
    _
  %s10 = ssub.s32 1, %s8
  %s11 = scalar_select 0, %s10, %s8
  %12 = sst [smem:[#allocation6]] %s0
  %13 = sst [smem:[#allocation7]] %s1
  $region1: #{tpu_custom_call.1} parent=0
    #allocation8 [shape = 'u8[4096]{0}', space=vmem, size = 0x1000, scoped, tag = 'input window, operand 2, single buffered']
    #allocation9 [shape = 's32[1]{0}', space=sflag, size = 0x4, scoped, tag = 'scoped memory for tpu_custom_call.1']
    #allocation10 [shape = 's32[1]{0}', space=sflag, size = 0x4, scoped, tag = 'scoped memory for tpu_custom_call.1']
    #allocation11 [shape = 'u8[4096]{0}', space=vmem, size = 0x1000, scoped, tag = 'output window, operand 0, single buffered']
    %14 = vsyncpa [#allocation9], 0
    %15 = vsyncpa [#allocation10], 0
    // Predicated region
    $region2: #{tpu_custom_call.1} parent=1 // pred_check
      _
    $region3: #{tpu_custom_call.1} parent=1 // pred_check_branch
      %17 = sbr.rel (0) target = $region5
    $region4: #{tpu_custom_call.1} parent=1 // pred_region
      %19 = vsyncadd [#allocation9], 0
      %s21 = sshll.u32 %s2, 4
      %s22 = int_to_ptr.hbm [resolvable:$true] %s21
      %s23 = sshll.u32 [#allocation8], 4
      %s24 = int_to_ptr.vmem [resolvable:$true] %s23
      %26 = dma.hbm_to_vmem [thread:$0]  %s22, 128, %s24, [#allocation9]
    $region5: #{tpu_custom_call.1} parent=1 // pred_fallthru
      _
    // Predicated region
    $region6: #{tpu_custom_call.1} parent=1 // pred_check
      _
    $region7: #{tpu_custom_call.1} parent=1 // pred_check_branch
      %28 = sbr.rel (0) target = $region9
    $region8: #{tpu_custom_call.1} parent=1 // pred_region
      _
    $region9: #{tpu_custom_call.1} parent=1 // pred_fallthru
      _
    // Predicated region
    $region10: #{tpu_custom_call.1} parent=1 // pred_check
      _
    $region11: #{tpu_custom_call.1} parent=1 // pred_check_branch
      %30 = sbr.rel (0) target = $region13
    $region12: #{tpu_custom_call.1} parent=1 // pred_region
      %32 = dma.done [#allocation9], 128
    $region13: #{tpu_custom_call.1} parent=1 // pred_fallthru
      _
    %p33 = scmp.eq.s32.totalorder 0, 0
    // Predicated region
    $region14: #{tpu_custom_call.1} parent=1 // pred_check
      %p34 = pneg %p33
    $region15: #{tpu_custom_call.1} parent=1 // pred_check_branch
      %36 = sbr.rel (%p34) target = $region17
    $region16: #{tpu_custom_call.1} parent=1 // pred_region
      %vm37 = vcmask 138240
      %38 = vst.msk [vmem:[#allocation2] sm:$0xff] %vm37, 0.0
      %vm39 = vcmask 64512
      %40 = vst.msk [vmem:[#allocation4] sm:$0xff] %vm39, -inf
      %41 = vst.msk [vmem:[#allocation3] sm:$0xff] %vm39, inf
    $region17: #{tpu_custom_call.1} parent=1 // pred_fallthru
      _
    %v42 = vld [vmem:[#allocation8] sm:$0xff]
    %v43 = vld [vmem:[%s3] sm:$0x1]
    %v44 = vlaneseq
    %v45 = vshrl.u32 %v44, 7
    %v46 = vperm.slane %v43, 0
    %vm47 = vcmp.eq.s32.totalorder %v46, %v45
    %v48 = vsel %vm47, 1, 0
    %v49 = vcvt.s32.f32 %v48
    %v50 = vmul.f32 %v42, %v42
    %v51 = vld [vmem:[#allocation2] sm:$0xff]
    %vm52 = vcmask 130048
    %v54 = vsel %vm52, %v49, 0
    %v57 = vsel %vm52, %v42, 0
    %v60 = vsel %vm52, %v50, 0
    %v63 = vsel %vm52, 1.0, 0
    %65 = vmatpush.xpose.msra.mxu0 0.0
    %66 = vmatpush.xpose.msra.mxu0 0.0
    %67 = vmatpush.xpose.msra.mxu0 0.0
    %68 = vmatpush.xpose.msra.mxu0 0.0
    %69 = vmatpush.xpose.msra.mxu0 0.0
    %70 = vmatpush.xpose.msra.mxu0 0.0
    %71 = vmatpush.xpose.msra.mxu0 0.0
    %72 = vmatpush.xpose.msra.mxu0 0.0
    %73 = vmatpush.xpose.msra.mxu0 0.0
    %74 = vmatpush.xpose.msra.mxu0 0.0
    %75 = vmatpush.xpose.msra.mxu0 0.0
    %76 = vmatpush.xpose.msra.mxu0 0.0
    %77 = vmatpush.xpose.msra.mxu0 0.0
    %78 = vmatpush.xpose.msra.mxu0 %v63
    %79 = vmatpush.xpose.msra.mxu0 %v60
    %80 = vmatpush.xpose.msra.mxu0 %v57
    %81 = vmatmul.f32.gmra.mxu0 %v54
    %v82 = vpop.f32.mrf.mxu0
    %v83 = vadd.f32 0.0, %v82
    %84 = vdwg.mxu0
    %v85 = vadd.f32 %v51, %v83
    %vm86 = vcmask 138240
    %87 = vst.msk [vmem:[#allocation2] sm:$0xff] %vm86, %v85
    %v88 = vlaneseq
    %v89 = vand.u32 %v88, 127
    %s90 = sld [smem:[#allocation6]]
    %s91 = sld [smem:[#allocation7]]
    %s92 = sadd.s32 %s91, 1
    // While loop
    $region18: #{tpu_custom_call.1} parent=1 // loop_pre_header
      _
    $region19: #{tpu_custom_call.1} parent=1 // loop_header
      %s94 = sphi %s90, %s96
      %p95 = scmp.ge.s32.totalorder %s94, %s92
    $region20: #{tpu_custom_call.1} parent=1 // loop_header_branch
      %98 = sbr.rel (%p95) target = $region24
    $region21: #{tpu_custom_call.1} parent=1 // loop_body
      %v99 = vstv %s94
      %vm100 = vcmp.eq.s32.totalorder %v43, %v99
      %v101 = vsel %vm100, 1, 0
      %v102 = vperm.slane %v101, 0
      %vm103 = vcmp.eq.s32.totalorder %v102, 1
      %v104 = vsel %vm103, %v42, -inf
      %v105 = vsel %vm52, %v104, -inf
      %106 = vmax.xlane.f32.xlu0 %v105
      %v107 = vpop.xlane.xlu0 %106
      %v108 = vsel %vm103, %v42, inf
      %v109 = vsel %vm52, %v108, inf
      %110 = vmin.xlane.f32.xlu0 %v109
      %v111 = vpop.xlane.xlu0 %110
      %vm112 = vcmp.eq.s32.totalorder %v89, %v99
      %v113 = vld [vmem:[#allocation4] sm:$0xff]
      %v114 = vmax.f32 %v113, %v107
      %v115 = vsel %vm112, %v114, %v113
      %vm116 = vcmask 64512
      %117 = vst.msk [vmem:[#allocation4] sm:$0xff] %vm116, %v115
      %v118 = vld [vmem:[#allocation3] sm:$0xff]
      %v119 = vmin.f32 %v118, %v111
      %v120 = vsel %vm112, %v119, %v118
      %121 = vst.msk [vmem:[#allocation3] sm:$0xff] %vm116, %v120
    $region22: #{tpu_custom_call.1} parent=1 // loop_footer
      %s96 = sadd.s32 %s94, 1
    $region23: #{tpu_custom_call.1} parent=1 // loop_footer_branch
      %93 = sbr.rel target = $region19
    $region24: #{tpu_custom_call.1} parent=1 // loop_exit
      _
    // Predicated region
    $region25: #{tpu_custom_call.1} parent=1 // pred_check
      %p122 = pneg %p33
    $region26: #{tpu_custom_call.1} parent=1 // pred_check_branch
      %124 = sbr.rel (%p122) target = $region28
    $region27: #{tpu_custom_call.1} parent=1 // pred_region
      %v125 = vld [vmem:[#allocation2] sm:$0xff]
      %vm126 = vcmp.gt.f32.partialorder %v125, 0.0
      %vm127 = vcmp.lt.s32.totalorder %v45, 4
      %vm128 = vmand %vm127, %vm126
      %v129 = vmax.f32 %v125, 1.0
      %v130 = vrcp.pop %v129
      %v131 = vmul.f32 %v129, %v130
      %v132 = vsub.f32 1.0, %v131
      %v133 = vmul.f32 %v130, %v132
      %v134 = vadd.f32 %v130, %v133
      %vm135 = vweird.f32 %v129
      %vm136 = vweird.f32 %v130
      %vm137 = vmor %vm135, %vm136
      %v138 = vsel %vm137, %v130, %v134
      %v139 = vand.u32 2147483647, %v129
      %vm140 = vcmp.eq.f32.partialorder %v139, 8.507059e+37
      %v141 = vand.u32 %v129, 2147483648
      %v142 = vor.u32 1.1754944e-38, %v141
      %v143 = vsel %vm140, %v142, %v138
      %v144 = vmul.f32 1.0, %v143
      %v145 = vsel %vm126, %v144, 0.0
      %147 = vset.pattern.permute.xlu0 16
      %148 = vperm.xlu0 %147, %v145
      %v149 = vpop.permute.xlu0 %148
      %v151 = vmul.f32 %v125, %v149
      %v152 = vmul.f32 %v151, %v151
      %154 = vrot.lane.b32.xlu0 %v152, 8
      %v155 = vpop.permute.xlu0 %154
      %v157 = vsub.f32 %v151, %v155
      $region29: #{tpu_custom_call.1} parent=27
        #allocation12 [shape = 'u8[16384]{0}', space=vmem, size = 0x4000, scoped, tag = 'scoped memory for tpu_custom_call.1']
        #allocation13 [shape = 'u8[65536]{0}', space=vmem, size = 0x10000, scoped, tag = 'scoped memory for tpu_custom_call.1']
        #allocation14 [shape = 'u8[4096]{0}', space=vmem, size = 0x1000, scoped, tag = 'scoped memory for tpu_custom_call.1']
        $region30: #{tpu_custom_call.1} parent=29
          #allocation15 [shape = 's32[1]{0}', space=sflag, size = 0x4, scoped, tag = 'scoped memory for tpu_custom_call.1']
          // Predicated region
          $region31: #{tpu_custom_call.1} parent=30 // pred_check
            _
          $region32: #{tpu_custom_call.1} parent=30 // pred_check_branch
            %159 = sbr.rel target = $region34
          $region33: #{tpu_custom_call.1} parent=30 // pred_region
            %160 = sst [smem:[#allocation18]] [#allocation17]
            %161 = sst [smem:[#allocation19]] [#allocation16]
          $region34: #{tpu_custom_call.1} parent=30 // pred_fallthru
            _
          %163 = shalt.err (0)
          %s165 = sshll.u32 %s4, 4
          %s166 = int_to_ptr.hbm [resolvable:$true] %s165
          %s167 = sshll.u32 [#allocation12], 4
          %s168 = int_to_ptr.vmem [resolvable:$true] %s167
          %170 = dma.hbm_to_vmem [thread:$0]  %s166, 512, %s168, [#allocation15]
          %s171 = smul.u32 32, 1
          %s172 = sshll.u32 %s171, 4
          %173 = dma.done [#allocation15], %s172
        $region35: #{tpu_custom_call.1} parent=29
          #allocation20 [shape = 's32[1]{0}', space=sflag, size = 0x4, scoped, tag = 'scoped memory for tpu_custom_call.1']
          // Predicated region
          $region36: #{tpu_custom_call.1} parent=35 // pred_check
            _
          $region37: #{tpu_custom_call.1} parent=35 // pred_check_branch
            %175 = sbr.rel target = $region39
          $region38: #{tpu_custom_call.1} parent=35 // pred_region
            %176 = sst [smem:[#allocation18]] [#allocation22]
            %177 = sst [smem:[#allocation19]] [#allocation21]
          $region39: #{tpu_custom_call.1} parent=35 // pred_fallthru
            _
          %179 = shalt.err (0)
          %s181 = sshll.u32 %s5, 4
          %s182 = int_to_ptr.hbm [resolvable:$true] %s181
          %s183 = sshll.u32 [#allocation13], 4
          %s184 = int_to_ptr.vmem [resolvable:$true] %s183
          %186 = dma.hbm_to_vmem [thread:$0]  %s182, 2048, %s184, [#allocation20]
          %s187 = smul.u32 128, 1
          %s188 = sshll.u32 %s187, 4
          %189 = dma.done [#allocation20], %s188
        $region40: #{tpu_custom_call.1} parent=29
          #allocation23 [shape = 's32[1]{0}', space=sflag, size = 0x4, scoped, tag = 'scoped memory for tpu_custom_call.1']
          // Predicated region
          $region41: #{tpu_custom_call.1} parent=40 // pred_check
            _
          $region42: #{tpu_custom_call.1} parent=40 // pred_check_branch
            %191 = sbr.rel target = $region44
          $region43: #{tpu_custom_call.1} parent=40 // pred_region
            %192 = sst [smem:[#allocation18]] [#allocation25]
            %193 = sst [smem:[#allocation19]] [#allocation24]
          $region44: #{tpu_custom_call.1} parent=40 // pred_fallthru
            _
          %195 = shalt.err (0)
          %s197 = sshll.u32 %s6, 4
          %s198 = int_to_ptr.hbm [resolvable:$true] %s197
          %s199 = sshll.u32 [#allocation14], 4
          %s200 = int_to_ptr.vmem [resolvable:$true] %s199
          %202 = dma.hbm_to_vmem [thread:$0]  %s198, 128, %s200, [#allocation23]
          %s203 = smul.u32 8, 1
          %s204 = sshll.u32 %s203, 4
          %205 = dma.done [#allocation23], %s204
        %v206 = vld [vmem:[#allocation12] sm:$0xff]
        %v207 = vld [vmem:[#allocation12 + $0x8] sm:$0xff]
        %v208 = vld [vmem:[#allocation12 + $0x10] sm:$0xff]
        %v209 = vld [vmem:[#allocation12 + $0x18] sm:$0xff]
        %v210 = vld [vmem:[#allocation3] sm:$0xff]
        %211 = vxpose.xlu0.b32.start [1/16] %v210, 128
        %212 = vxpose.xlu0.b32.cont [2/16] 0.0, 128
        %213 = vxpose.xlu0.b32.cont [3/16] 0.0, 128
        %214 = vxpose.xlu0.b32.cont [4/16] 0.0, 128
        %215 = vxpose.xlu0.b32.cont [5/16] 0.0, 128
        %216 = vxpose.xlu0.b32.cont [6/16] 0.0, 128
        %217 = vxpose.xlu0.b32.cont [7/16] 0.0, 128
        %218 = vxpose.xlu0.b32.cont [8/16] 0.0, 128
        %219 = vxpose.xlu0.b32.cont [9/16] 0.0, 128
        %220 = vxpose.xlu0.b32.cont [10/16] 0.0, 128
        %221 = vxpose.xlu0.b32.cont [11/16] 0.0, 128
        %222 = vxpose.xlu0.b32.cont [12/16] 0.0, 128
        %223 = vxpose.xlu0.b32.cont [13/16] 0.0, 128
        %224 = vxpose.xlu0.b32.cont [14/16] 0.0, 128
        %225 = vxpose.xlu0.b32.cont [15/16] 0.0, 128
        %226 = vxpose.xlu0.b32.end [16/16] 0.0, 128
        %v227 = vpop.trf.xlu0
        %v228 = vpop.trf.xlu0
        %v229 = vpop.trf.xlu0
        %v230 = vpop.trf.xlu0
        %v231 = vpop.trf.xlu0
        %v232 = vpop.trf.xlu0
        %v233 = vpop.trf.xlu0
        %v234 = vpop.trf.xlu0
        %v235 = vpop.trf.xlu0
        %v236 = vpop.trf.xlu0
        %v237 = vpop.trf.xlu0
        %v238 = vpop.trf.xlu0
        %v239 = vpop.trf.xlu0
        %v240 = vpop.trf.xlu0
        %v241 = vpop.trf.xlu0
        %v242 = vpop.trf.xlu0
        %vm243 = vcmask 64512
        %v245 = vsel %vm243, %v227, 0
        %247 = vmatpush.msra.mxu0 0.0
        %248 = vmatpush.msra.mxu0 0.0
        %249 = vmatpush.msra.mxu0 0.0
        %250 = vmatpush.msra.mxu0 0.0
        %251 = vmatpush.msra.mxu0 0.0
        %252 = vmatpush.msra.mxu0 0.0
        %253 = vmatpush.msra.mxu0 0.0
        %254 = vmatpush.msra.mxu0 0.0
        %255 = vmatpush.msra.mxu0 0.0
        %256 = vmatpush.msra.mxu0 0.0
        %257 = vmatpush.msra.mxu0 0.0
        %258 = vmatpush.msra.mxu0 0.0
        %259 = vmatpush.msra.mxu0 0.0
        %260 = vmatpush.msra.mxu0 0.0
        %261 = vmatpush.msra.mxu0 0.0
        %262 = vmatpush.msra.mxu0 %v207
        %263 = vmatmul.f32.gmra.mxu0 %v245
        %v264 = vpop.f32.mrf.mxu0
        %v265 = vadd.f32 0.0, %v264
        %266 = vdwg.mxu0
        %v268 = vsel %vm243, %v151, 0
        %270 = vmatpush.msra.mxu0 0.0
        %271 = vmatpush.msra.mxu0 0.0
        %272 = vmatpush.msra.mxu0 0.0
        %273 = vmatpush.msra.mxu0 0.0
        %274 = vmatpush.msra.mxu0 0.0
        %275 = vmatpush.msra.mxu0 0.0
        %276 = vmatpush.msra.mxu0 0.0
        %277 = vmatpush.msra.mxu0 0.0
        %278 = vmatpush.msra.mxu0 0.0
        %279 = vmatpush.msra.mxu0 0.0
        %280 = vmatpush.msra.mxu0 0.0
        %281 = vmatpush.msra.mxu0 0.0
        %282 = vmatpush.msra.mxu0 0.0
        %283 = vmatpush.msra.mxu0 0.0
        %284 = vmatpush.msra.mxu0 0.0
        %285 = vmatpush.msra.mxu0 %v206
        %286 = vmatmul.f32.gmra.mxu0 %v268
        %v287 = vpop.f32.mrf.mxu0
        %v288 = vadd.f32 %v265, %v287
        %289 = vdwg.mxu0
        %v290 = vld [vmem:[#allocation4] sm:$0xff]
        %291 = vxpose.xlu0.b32.start [1/16] %v290, 128
        %292 = vxpose.xlu0.b32.cont [2/16] 0.0, 128
        %293 = vxpose.xlu0.b32.cont [3/16] 0.0, 128
        %294 = vxpose.xlu0.b32.cont [4/16] 0.0, 128
        %295 = vxpose.xlu0.b32.cont [5/16] 0.0, 128
        %296 = vxpose.xlu0.b32.cont [6/16] 0.0, 128
        %297 = vxpose.xlu0.b32.cont [7/16] 0.0, 128
        %298 = vxpose.xlu0.b32.cont [8/16] 0.0, 128
        %299 = vxpose.xlu0.b32.cont [9/16] 0.0, 128
        %300 = vxpose.xlu0.b32.cont [10/16] 0.0, 128
        %301 = vxpose.xlu0.b32.cont [11/16] 0.0, 128
        %302 = vxpose.xlu0.b32.cont [12/16] 0.0, 128
        %303 = vxpose.xlu0.b32.cont [13/16] 0.0, 128
        %304 = vxpose.xlu0.b32.cont [14/16] 0.0, 128
        %305 = vxpose.xlu0.b32.cont [15/16] 0.0, 128
        %306 = vxpose.xlu0.b32.end [16/16] 0.0, 128
        %v307 = vpop.trf.xlu0
        %v308 = vpop.trf.xlu0
        %v309 = vpop.trf.xlu0
        %v310 = vpop.trf.xlu0
        %v311 = vpop.trf.xlu0
        %v312 = vpop.trf.xlu0
        %v313 = vpop.trf.xlu0
        %v314 = vpop.trf.xlu0
        %v315 = vpop.trf.xlu0
        %v316 = vpop.trf.xlu0
        %v317 = vpop.trf.xlu0
        %v318 = vpop.trf.xlu0
        %v319 = vpop.trf.xlu0
        %v320 = vpop.trf.xlu0
        %v321 = vpop.trf.xlu0
        %v322 = vpop.trf.xlu0
        %v324 = vsel %vm243, %v307, 0
        %326 = vmatpush.msra.mxu0 0.0
        %327 = vmatpush.msra.mxu0 0.0
        %328 = vmatpush.msra.mxu0 0.0
        %329 = vmatpush.msra.mxu0 0.0
        %330 = vmatpush.msra.mxu0 0.0
        %331 = vmatpush.msra.mxu0 0.0
        %332 = vmatpush.msra.mxu0 0.0
        %333 = vmatpush.msra.mxu0 0.0
        %334 = vmatpush.msra.mxu0 0.0
        %335 = vmatpush.msra.mxu0 0.0
        %336 = vmatpush.msra.mxu0 0.0
        %337 = vmatpush.msra.mxu0 0.0
        %338 = vmatpush.msra.mxu0 0.0
        %339 = vmatpush.msra.mxu0 0.0
        %340 = vmatpush.msra.mxu0 0.0
        %341 = vmatpush.msra.mxu0 %v208
        %342 = vmatmul.f32.gmra.mxu0 %v324
        %v343 = vpop.f32.mrf.mxu0
        %v344 = vadd.f32 0.0, %v343
        %345 = vdwg.mxu0
        %v346 = vadd.f32 %v288, %v344
        %348 = vrot.lane.b32.xlu0 %v157, 120
        %v349 = vpop.permute.xlu0 %348
        %v350 = vsel %vm243, %v349, 0
        %352 = vmatpush.msra.mxu0 0.0
        %353 = vmatpush.msra.mxu0 0.0
        %354 = vmatpush.msra.mxu0 0.0
        %355 = vmatpush.msra.mxu0 0.0
        %356 = vmatpush.msra.mxu0 0.0
        %357 = vmatpush.msra.mxu0 0.0
        %358 = vmatpush.msra.mxu0 0.0
        %359 = vmatpush.msra.mxu0 0.0
        %360 = vmatpush.msra.mxu0 0.0
        %361 = vmatpush.msra.mxu0 0.0
        %362 = vmatpush.msra.mxu0 0.0
        %363 = vmatpush.msra.mxu0 0.0
        %364 = vmatpush.msra.mxu0 0.0
        %365 = vmatpush.msra.mxu0 0.0
        %366 = vmatpush.msra.mxu0 0.0
        %367 = vmatpush.msra.mxu0 %v209
        %368 = vmatmul.f32.gmra.mxu0 %v350
        %v369 = vpop.f32.mrf.mxu0
        %v370 = vadd.f32 0.0, %v369
        %371 = vdwg.mxu0
        %v372 = vadd.f32 %v346, %v370
        %v373 = vld [vmem:[#allocation14] sm:$0x1]
        %v374 = vperm.slane %v373, 0
        %v375 = vadd.f32 %v372, %v374
        %v376 = vsel %vm128, 1, 0
        %377 = vset.pattern.permute.xlu0 16
        %378 = vperm.xlu0 %377, %v376
        %v379 = vpop.permute.xlu0 %378
        %vm380 = vcmp.eq.s32.totalorder %v379, 1
        %v381 = vsel %vm380, %v375, 0.0
        %v382 = vsel %vm127, 1, 0
        %v383 = vcvt.s32.f32 %v382
        %v384 = vmul.f32 %v381, %v383
        %v385 = vrot.slane %v384, 4
        %v386 = vadd.f32 %v384, %v385
        %v387 = vrot.slane %v386, 2
        %v388 = vadd.f32 %v386, %v387
        %v389 = vrot.slane %v388, 1
        %v390 = vadd.f32 %v388, %v389
        %v391 = vmul.f32 %v390, 0.25
        %v392 = vsub.f32 %v381, %v391
        %v393 = vmul.f32 %v392, %v392
        %v394 = vmul.f32 %v393, %v383
        %v395 = vrot.slane %v394, 4
        %v396 = vadd.f32 %v394, %v395
        %v397 = vrot.slane %v396, 2
        %v398 = vadd.f32 %v396, %v397
        %v399 = vrot.slane %v398, 1
        %v400 = vadd.f32 %v398, %v399
        %v401 = vmul.f32 %v400, 0.25
        %v402 = vadd.f32 %v401, 1e-05
        %v403 = vrsqrt.pop %v402
        %v404 = vmul.f32 %v403, %v402
        %v405 = vmul.f32 %v404, %v403
        %v406 = vmul.f32 0.5, %v405
        %v407 = vsub.f32 1.5, %v406
        %v408 = vmul.f32 %v403, %v407
        %vm409 = vweird.f32 %v402
        %vm410 = vweird.f32 %v403
        %vm411 = vmor %vm409, %vm410
        %v412 = vsel %vm411, %v403, %v408
        %v413 = vmul.f32 %v392, %v412
        %v414 = vld [vmem:[#allocation14 + $0x1] sm:$0x1]
        %v415 = vperm.slane %v414, 0
        %v416 = vmul.f32 %v413, %v415
        %v417 = vld [vmem:[#allocation14 + $0x2] sm:$0x1]
        %v418 = vperm.slane %v417, 0
        %v419 = vadd.f32 %v416, %v418
        %v420 = vmax.f32 %v419, 0.0
        %v421 = vld [vmem:[#allocation13] sm:$0xff]
        %v422 = vld [vmem:[#allocation13 + $0x8] sm:$0xff]
        %v423 = vld [vmem:[#allocation13 + $0x10] sm:$0xff]
        %v424 = vld [vmem:[#allocation13 + $0x18] sm:$0xff]
        %v425 = vld [vmem:[#allocation13 + $0x20] sm:$0xff]
        %v426 = vld [vmem:[#allocation13 + $0x28] sm:$0xff]
        %v427 = vld [vmem:[#allocation13 + $0x30] sm:$0xff]
        %v428 = vld [vmem:[#allocation13 + $0x38] sm:$0xff]
        %v429 = vld [vmem:[#allocation13 + $0x40] sm:$0xff]
        %v430 = vld [vmem:[#allocation13 + $0x48] sm:$0xff]
        %v431 = vld [vmem:[#allocation13 + $0x50] sm:$0xff]
        %v432 = vld [vmem:[#allocation13 + $0x58] sm:$0xff]
        %v433 = vld [vmem:[#allocation13 + $0x60] sm:$0xff]
        %v434 = vld [vmem:[#allocation13 + $0x68] sm:$0xff]
        %v435 = vld [vmem:[#allocation13 + $0x70] sm:$0xff]
        %v436 = vld [vmem:[#allocation13 + $0x78] sm:$0xff]
        %v437 = vld [vmem:[#allocation14 + $0x3] sm:$0x1]
        %v438 = vperm.slane %v437, 0
        %439 = vmatpush.msra.mxu0 %v436
        %440 = vmatpush.msra.mxu0 %v435
        %441 = vmatpush.msra.mxu0 %v434
        %442 = vmatpush.msra.mxu0 %v433
        %443 = vmatpush.msra.mxu0 %v432
        %444 = vmatpush.msra.mxu0 %v431
        %445 = vmatpush.msra.mxu0 %v430
        %446 = vmatpush.msra.mxu0 %v429
        %447 = vmatpush.msra.mxu0 %v428
        %448 = vmatpush.msra.mxu0 %v427
        %449 = vmatpush.msra.mxu0 %v426
        %450 = vmatpush.msra.mxu0 %v425
        %451 = vmatpush.msra.mxu0 %v424
        %452 = vmatpush.msra.mxu0 %v423
        %453 = vmatpush.msra.mxu0 %v422
        %454 = vmatpush.msra.mxu0 %v421
        %455 = vmatmul.f32.gmra.mxu0 %v420
        %v456 = vpop.f32.mrf.mxu0
        %v457 = vadd.f32 %v438, %v456
        %458 = vdwg.mxu0
        %459 = vst [vmem:[#allocation11] sm:$0xff] %v457
    $region28: #{tpu_custom_call.1} parent=1 // pred_fallthru
      _
    // Predicated region
    $region45: #{tpu_custom_call.1} parent=1 // pred_check
      _
    $region46: #{tpu_custom_call.1} parent=1 // pred_check_branch
      %461 = sbr.rel (0) target = $region48
    $region47: #{tpu_custom_call.1} parent=1 // pred_region
      %463 = vsyncadd [#allocation10], 0
      %s465 = sshll.u32 [#allocation11], 4
      %s466 = int_to_ptr.vmem [resolvable:$true] %s465
      %s467 = sshll.u32 %s7, 4
      %s468 = int_to_ptr.hbm [resolvable:$true] %s467
      %470 = dma.vmem_to_hbm [thread:$0]  %s466, 128, %s468, [#allocation10]
    $region48: #{tpu_custom_call.1} parent=1 // pred_fallthru
      _
    // Predicated region
    $region49: #{tpu_custom_call.1} parent=1 // pred_check
      _
    $region50: #{tpu_custom_call.1} parent=1 // pred_check_branch
      %472 = sbr.rel (0) target = $region52
    $region51: #{tpu_custom_call.1} parent=1 // pred_region
      %474 = dma.done [#allocation10], 128
    $region52: #{tpu_custom_call.1} parent=1 // pred_fallthru
      _
    %475 = vsyncpa [#allocation9], 1
    %476 = vsyncpa [#allocation10], 1

</llo_original>
